<compile_context>
chip_gen: v7x
topology: tpu7x:2x2x1
jax: 0.10.0
libtpu: 0.0.40
codegen_flags: <defaults>
</compile_context>

<pallas_src>
from functools import partial

import jax
import jax.numpy as jnp
from jax.experimental import pallas as pl
from jax.experimental.pallas import tpu as pltpu


# ----------------------------- kernels ------------------------------------


def _fused_kernel(x_ref, w1_ref, w2_ref, o_ref, *, inv_hw, gate_in_input_dtype):
    # x_ref/o_ref: (1, C, HW);  w1_ref: (Cr, C);  w2_ref: (C, Cr)  (native dtypes)
    x = x_ref[0]                                                    # (C, HW)
    xf = x.astype(jnp.float32)
    mean = jnp.sum(xf, axis=-1, keepdims=True) * inv_hw             # (C, 1) channel means
    hid = jnp.maximum(
        jnp.dot(w1_ref[...].astype(jnp.float32), mean,
                preferred_element_type=jnp.float32), 0.0)           # (Cr, 1)  ReLU
    gate = jax.nn.sigmoid(
        jnp.dot(w2_ref[...].astype(jnp.float32), hid,
                preferred_element_type=jnp.float32))                # (C, 1)   Sigmoid
    if gate_in_input_dtype:                                         # bf16/f16 activations
        o_ref[0] = x * gate.astype(x.dtype)
    else:                                                           # f32 activations
        o_ref[0] = (xf * gate).astype(o_ref.dtype)


def _pool_kernel(x_ref, sum_ref, *, hw, hw_blk):
    # x_ref: (1, C, hw_blk);  sum_ref: (1, C, 1) f32 resident accumulator
    h = pl.program_id(1)

    @pl.when(h == 0)
    def _init():
        sum_ref[...] = jnp.zeros_like(sum_ref)

    xf = x_ref[...].astype(jnp.float32)
    if hw % hw_blk != 0:                       # mask undefined lanes of the boundary block
        lane = jax.lax.broadcasted_iota(jnp.int32, xf.shape, 2)
        xf = jnp.where(h * hw_blk + lane < hw, xf, 0.0)
    sum_ref[...] += jnp.sum(xf, axis=-1, keepdims=True)


def _gate_kernel(x_ref, scale_ref, o_ref, *, gate_in_input_dtype):
    # x_ref/o_ref: (1, C, hw_blk);  scale_ref: (1, C, 1) f32
    x = x_ref[...]
    if gate_in_input_dtype:
        o_ref[...] = x * scale_ref[...].astype(x.dtype)
    else:
        o_ref[...] = (x.astype(jnp.float32) * scale_ref[...]).astype(o_ref.dtype)


# ----------------------------- wrapper ------------------------------------

_FUSED_VMEM_BUDGET = 28 * 1024 * 1024      # 2x(in) + 2x(out) slabs + weights must fit this
_FUSED_VMEM_LIMIT = 40 * 1024 * 1024       # scoped limit; < v7x's 64 MiB physical VMEM
_FALLBACK_VMEM_LIMIT = 32 * 1024 * 1024
_FALLBACK_BLOCK_BYTES = 4 * 1024 * 1024    # per-tile target for the streaming passes


def _pick_hw_block(hw, c, bytes_per_elem, target_bytes):
    """Lane-dense (multiple-of-128) tile of the flattened spatial dim within a VMEM budget."""
    max_lanes = max(128, (target_bytes // (bytes_per_elem * c)) // 128 * 128)
    if hw <= max_lanes:
        return hw                          # full row: always a legal block shape
    b = max_lanes
    while b >= 128:                        # prefer an exact divisor (no boundary block)
        if hw % b == 0:
            return b
        b -= 128
    return max_lanes                       # no 128-multiple divisor: cdiv grid + lane mask


def se_layer_forward(x, w1, w2, *, force_two_pass=False, block_target_bytes=None):
    """x: (N, C, H, W). w1: (C//r, C). w2: (C, C//r). Returns (N, C, H, W)."""
    N, C, H, W = x.shape
    HW = H * W
    x3 = x.reshape(N, C, HW)               # free contiguous view, lane-dense last dim
    itemsize = x.dtype.itemsize
    gate_in_input_dtype = itemsize <= 2    # bf16/f16: gate in native dtype (v6e/v7x VPU)

    w_bytes = w1.size * w1.dtype.itemsize + w2.size * w2.dtype.itemsize
    slab_bytes = C * HW * itemsize
    fused_fits = (4 * slab_bytes + w_bytes) <= _FUSED_VMEM_BUDGET

    if fused_fits and not force_two_pass:
        # ---- Fused path: pool + excite + gate in one pass over x (2*|x| HBM traffic) ----
        out3 = pl.pallas_call(
            partial(_fused_kernel, inv_hw=1.0 / float(HW),
                    gate_in_input_dtype=gate_in_input_dtype),
            out_shape=jax.ShapeDtypeStruct((N, C, HW), x.dtype),
            grid=(N,),
            in_specs=[
                pl.BlockSpec((1, C, HW), lambda n: (n, 0, 0)),
                pl.BlockSpec(memory_space=pltpu.MemorySpace.VMEM),   # w1 whole, native dtype
                pl.BlockSpec(memory_space=pltpu.MemorySpace.VMEM),   # w2 whole, native dtype
            ],
            out_specs=pl.BlockSpec((1, C, HW), lambda n: (n, 0, 0)),
            compiler_params=pltpu.CompilerParams(
                dimension_semantics=("parallel",),
                vmem_limit_bytes=_FUSED_VMEM_LIMIT),
        )(x3, w1, w2)
        # TODO(synk): alias x -> out (input_output_aliases={0: 0}) when the caller donates x.
        return out3.reshape(N, C, H, W)

    # ---- Fallback: two streaming passes (per-sample slab too large for VMEM) ----
    tgt = _FALLBACK_BLOCK_BYTES if block_target_bytes is None else block_target_bytes
    hw_blk = _pick_hw_block(HW, C, itemsize, tgt)
    n_hw = pl.cdiv(HW, hw_blk)

    # Pass 1: f32 channel sums, resident accumulator across the "arbitrary" HW axis.
    # TODO(synk): for N == 1 on v7x, split HW into an extra "parallel" outer axis of partial
    #             sums so both TensorCores participate in the pooling pass.
    pooled = pl.pallas_call(
        partial(_pool_kernel, hw=HW, hw_blk=hw_blk),
        out_shape=jax.ShapeDtypeStruct((N, C, 1), jnp.float32),
        grid=(N, n_hw),
        in_specs=[pl.BlockSpec((1, C, hw_blk), lambda n, h: (n, 0, h))],
        out_specs=pl.BlockSpec((1, C, 1), lambda n, h: (n, 0, 0)),
        compiler_params=pltpu.CompilerParams(
            dimension_semantics=("parallel", "arbitrary"),
            vmem_limit_bytes=_FALLBACK_VMEM_LIMIT),
    )(x3)

    # Excite MLP batched over N in plain XLA: tiny, proper MXU shapes, f32 accumulation.
    mean = pooled[:, :, 0] * (1.0 / float(HW))                            # (N, C)
    hid = jnp.maximum(jnp.dot(mean, w1.astype(jnp.float32).T,
                              preferred_element_type=jnp.float32), 0.0)   # (N, Cr)
    gate = jax.nn.sigmoid(jnp.dot(hid, w2.astype(jnp.float32).T,
                                  preferred_element_type=jnp.float32))    # (N, C)
    gate3 = gate[:, :, None]                                              # (N, C, 1)

    # Pass 2: per-channel gate, lane-dense tiles, both grid axes megacore-parallel.
    out3 = pl.pallas_call(
        partial(_gate_kernel, gate_in_input_dtype=gate_in_input_dtype),
        out_shape=jax.ShapeDtypeStruct((N, C, HW), x.dtype),
        grid=(N, n_hw),
        in_specs=[
            pl.BlockSpec((1, C, hw_blk), lambda n, h: (n, 0, h)),
            pl.BlockSpec((1, C, 1), lambda n, h: (n, 0, 0)),
        ],
        out_specs=pl.BlockSpec((1, C, hw_blk), lambda n, h: (n, 0, h)),
        compiler_params=pltpu.CompilerParams(
            dimension_semantics=("parallel", "parallel"),
            vmem_limit_bytes=_FALLBACK_VMEM_LIMIT),
    )(x3, gate3)
    # TODO(synk): add input_output_aliases here too when x is donated by the caller.
    return out3.reshape(N, C, H, W)


# ------------------------------- test --------------------------------------

if __name__ == "__main__":
    key = jax.random.PRNGKey(0)
    k_x, k_w1, k_w2, k_x2 = jax.random.split(key, 4)

    N, C, H, W = 2, 8, 16, 16
    reduction = 4
    Cr = C // reduction

    x = jax.random.normal(k_x, (N, C, H, W), dtype=jnp.float32)

    # PyTorch Linear(bias=False) default init: U(-1/sqrt(fan_in), 1/sqrt(fan_in)).
    b1 = 1.0 / (C ** 0.5)
    b2 = 1.0 / (Cr ** 0.5)
    w1 = jax.random.uniform(k_w1, (Cr, C), minval=-b1, maxval=b1, dtype=jnp.float32)
    w2 = jax.random.uniform(k_w2, (C, Cr), minval=-b2, maxval=b2, dtype=jnp.float32)

    def ref_fn(xx):
        y = jnp.mean(xx, axis=(2, 3))                   # (N, C)
        hid = jnp.maximum(y @ w1.T, 0.0)                # (N, Cr)
        s = jax.nn.sigmoid(hid @ w2.T)                  # (N, C)
        return xx * s[:, :, None, None]

    # 1) Fused single-pass path (default for shapes that fit VMEM).
    out = se_layer_forward(x, w1, w2)
    jax.block_until_ready(out)
    assert out.shape == (N, C, H, W) and out.dtype == x.dtype
    err = float(jnp.max(jnp.abs(out - ref_fn(x))))
    assert jnp.allclose(out, ref_fn(x), rtol=1e-4, atol=1e-5), err

    # 2) Two-pass streaming fallback, forced with tiny blocks so the cdiv grid and the
    #    boundary-lane masking are exercised (HW = 18*18 = 324 has no 128-multiple divisor).
    H2 = W2 = 18
    x2 = jax.random.normal(k_x2, (N, C, H2, W2), dtype=jnp.float32)
    out2 = se_layer_forward(x2, w1, w2, force_two_pass=True, block_target_bytes=4096)
    jax.block_until_ready(out2)
    err2 = float(jnp.max(jnp.abs(out2 - ref_fn(x2))))
    assert jnp.allclose(out2, ref_fn(x2), rtol=1e-4, atol=1e-5), err2

    print("KERNEL_OK")
</pallas_src>

<mosaic_0001>
module attributes {stable_mosaic.version = 11 : i64} {
  func.func @_fused_kernel(%arg0: i32, %arg1: memref<1x8x256xf32, #tpu.memory_space<vmem>>, %arg2: memref<2x8xf32, #tpu.memory_space<vmem>>, %arg3: memref<8x2xf32, #tpu.memory_space<vmem>>, %arg4: memref<1x8x256xf32, #tpu.memory_space<vmem>>) attributes {dimension_semantics = [#tpu.dimension_semantics<parallel>], iteration_bounds = array<i64: 2>, scalar_prefetch = 0 : i64, scratch_operands = 0 : i64, tpu.core_type = #tpu.core_type<tc>, window_params = [{transform_indices = @transform_0, window_bounds = array<i64: 1, 8, 256>}, {pipeline_mode = #tpu.pipeline_mode<synchronous>, transform_indices = @transform_1, window_bounds = array<i64: 2, 8>}, {pipeline_mode = #tpu.pipeline_mode<synchronous>, transform_indices = @transform_2, window_bounds = array<i64: 8, 2>}, {transform_indices = @transform_3, window_bounds = array<i64: 1, 8, 256>}]} {
    %c0 = arith.constant 0 : index
    %c0_0 = arith.constant 0 : index
    %c0_1 = arith.constant 0 : index
    %0 = vector.load %arg1[%c0, %c0_0, %c0_1] : memref<1x8x256xf32, #tpu.memory_space<vmem>>, vector<1x8x256xf32>
    %1 = vector.shape_cast %0 : vector<1x8x256xf32> to vector<8x256xf32>
    %cst = arith.constant dense<0.000000e+00> : vector<8xf32>
    %2 = vector.multi_reduction <add>, %1, %cst [1] : vector<8x256xf32> to vector<8xf32>
    %3 = vector.shape_cast %2 : vector<8xf32> to vector<8x1xf32>
    %cst_2 = arith.constant 3.906250e-03 : f32
    %4 = vector.broadcast %cst_2 : f32 to vector<8x1xf32>
    %5 = arith.mulf %3, %4 : vector<8x1xf32>
    %c0_3 = arith.constant 0 : index
    %c0_4 = arith.constant 0 : index
    %6 = vector.load %arg2[%c0_3, %c0_4] : memref<2x8xf32, #tpu.memory_space<vmem>>, vector<2x8xf32>
    %cst_5 = arith.constant dense<0.000000e+00> : vector<2x1xf32>
    %7 = tpu.matmul %6, %5, %cst_5 {dimension_numbers = #tpu.dot_dimension_numbers<[1], [0], [0], [1], [0, 0, 1, 1], [], []>} : vector<2x8xf32>, vector<8x1xf32>, vector<2x1xf32> -> vector<2x1xf32>
    %cst_6 = arith.constant 0.000000e+00 : f32
    %8 = vector.broadcast %cst_6 : f32 to vector<2x1xf32>
    %9 = arith.maximumf %7, %8 : vector<2x1xf32>
    %c0_7 = arith.constant 0 : index
    %c0_8 = arith.constant 0 : index
    %10 = vector.load %arg3[%c0_7, %c0_8] : memref<8x2xf32, #tpu.memory_space<vmem>>, vector<8x2xf32>
    %cst_9 = arith.constant dense<0.000000e+00> : vector<8x1xf32>
    %11 = tpu.matmul %10, %9, %cst_9 {dimension_numbers = #tpu.dot_dimension_numbers<[1], [0], [0], [1], [0, 0, 1, 1], [], []>} : vector<8x2xf32>, vector<2x1xf32>, vector<8x1xf32> -> vector<8x1xf32>
    %12 = arith.negf %11 : vector<8x1xf32>
    %13 = math.exp %12 : vector<8x1xf32>
    %cst_10 = arith.constant 1.000000e+00 : f32
    %14 = vector.broadcast %cst_10 : f32 to vector<8x1xf32>
    %15 = arith.addf %14, %13 : vector<8x1xf32>
    %16 = arith.divf %14, %15 : vector<8x1xf32>
    %17 = vector.broadcast %16 : vector<8x1xf32> to vector<8x256xf32>
    %18 = arith.mulf %1, %17 : vector<8x256xf32>
    %c0_11 = arith.constant 0 : index
    %c0_12 = arith.constant 0 : index
    %c0_13 = arith.constant 0 : index
    %19 = vector.load %arg4[%c0_11, %c0_12, %c0_13] : memref<1x8x256xf32, #tpu.memory_space<vmem>>, vector<1x8x256xf32>
    %20 = vector.shape_cast %19 : vector<1x8x256xf32> to vector<8x256xf32>
    %21 = vector.shape_cast %18 : vector<8x256xf32> to vector<1x8x256xf32>
    tpu.vector_store %arg4[%c0_11, %c0_12, %c0_13], %21 {strides = array<i32>} : memref<1x8x256xf32, #tpu.memory_space<vmem>>, vector<1x8x256xf32>,
    return
  }
  func.func @transform_0(%arg0: i32) -> (i32, i32, i32) {
    %c0_i32 = arith.constant 0 : i32
    %c0_i32_0 = arith.constant 0 : i32
    %c0_i32_1 = arith.constant 0 : i32
    return %arg0, %c0_i32, %c0_i32_0 : i32, i32, i32
  }
  func.func @transform_1(%arg0: i32) -> (i32, i32) {
    %c0_i32 = arith.constant 0 : i32
    %c0_i32_0 = arith.constant 0 : i32
    %c0_i32_1 = arith.constant 0 : i32
    return %c0_i32, %c0_i32_0 : i32, i32
  }
  func.func @transform_2(%arg0: i32) -> (i32, i32) {
    %c0_i32 = arith.constant 0 : i32
    %c0_i32_0 = arith.constant 0 : i32
    %c0_i32_1 = arith.constant 0 : i32
    return %c0_i32, %c0_i32_0 : i32, i32
  }
  func.func @transform_3(%arg0: i32) -> (i32, i32, i32) {
    %c0_i32 = arith.constant 0 : i32
    %c0_i32_0 = arith.constant 0 : i32
    %c0_i32_1 = arith.constant 0 : i32
    return %arg0, %c0_i32, %c0_i32_0 : i32, i32, i32
  }
}

</mosaic_0001>

<llo_original>
// kernel: tpu_custom_call.1
$region0: #{tpu_custom_call.1}
  #allocation0 [shape = 'u32[]', space=smem, size = 0x4, offset = 0x4, fixed_abs, tag = 'smem constant byte address 0x4 - core index']
  #allocation1 [shape = 'u32[144,128]{1,0:T(1,128)}', space=vmem, size = 0x12000, scoped, tag = 'internal scratch']
  %s0 = inlined_call_operand.hbm [shape: f32[2,8,256], index: 0, kind: input, shape index: {}]
  %s1 = inlined_call_operand.vmem [shape: f32[2,8], index: 1, kind: input, shape index: {}]
  %s2 = inlined_call_operand.vmem [shape: f32[8,2], index: 2, kind: input, shape index: {}]
  %s3 = inlined_call_operand.hbm [shape: f32[2,8,256], index: 3, kind: output, shape index: {}]
  %s4 = sld [smem:[#allocation0]]
  $region49: #{tpu_custom_call.1} parent=0
    _
  %s6 = ssub.s32 1, %s4
  %s7 = scalar_select 0, %s6, %s4
  $region1: #{tpu_custom_call.1} parent=0
    #allocation2 [shape = 'u8[16384]{0}', space=vmem, size = 0x4000, scoped, tag = 'input window, operand 0']
    #allocation3 [shape = 's32[2]{0}', space=sflag, size = 0x8, scoped, tag = 'scoped memory for tpu_custom_call.1']
    #allocation4 [shape = 's32[2]{0}', space=sflag, size = 0x8, scoped, tag = 'scoped memory for tpu_custom_call.1']
    #allocation5 [shape = 'u8[16384]{0}', space=vmem, size = 0x4000, scoped, tag = 'output window, operand 0']
    %8 = vsyncpa [#allocation3], 0
    %s9 = scalar_lea.sflag [#allocation3], 1
    %10 = vsyncpa %s9, 0
    %11 = vsyncpa [#allocation4], 0
    %s12 = scalar_lea.sflag [#allocation4], 1
    %13 = vsyncpa %s12, 0
    loop: start=0, step=1, limit=4
    $region2: #{tpu_custom_call.1} parent=1 // loop_pre_header
      _
    $region3: #{tpu_custom_call.1} parent=1 // loop_header
      %s15 = sphi 0, %s19
      %p16 = scmp.ge.s32.totalorder %s15, 4
      %s25 = sphi 0, %s27
      %s28 = sphi 0, %s25
      %s29 = sphi 0, %s28
      %s45 = sphi 0, %s29
      %s49 = sphi 0, %s49
      %s51 = sphi 0, %s49
      %s52 = sphi 0, %s51
      %s66 = sphi 0, %s52
      %s70 = sphi 0, %s70
      %s72 = sphi 0, %s70
      %s73 = sphi 0, %s72
      %s87 = sphi 0, %s73
      %s93 = sphi 0, %s95
      %s96 = sphi 0, %s93
      %s97 = sphi 0, %s96
      %s113 = sphi 0, %s97
    $region4: #{tpu_custom_call.1} parent=1 // loop_header_branch
      %18 = sbr.rel (%p16) target = $region8
    $region5: #{tpu_custom_call.1} parent=1 // loop_body
      %s20 = ssub.s32 %s15, 1
      %s21 = ssub.s32 %s15, 2
      %s22 = sadd.s32 %s15, 1
      %s23 = ssub.s32 %s15, %s22
      %p24 = scmp.eq.s32.totalorder %s23, 0
      %s26 = sadd.s32 %s25, 1
      %s27 = scalar_select %p24, %s25, %s26
      %p30 = pneg %p24
      %p31 = scmp.eq.s32.totalorder %s15, 1
      %p32 = por %p30, %p31
      %p33 = scmp.ne.s32.totalorder %s25, %s28
      %p34 = scmp.eq.s32.totalorder %s15, 0
      %p35 = por %p33, %p34
      %p36 = scmp.ne.s32.totalorder %s25, %s28
      %p37 = scmp.eq.s32.totalorder %s20, 1
      %p38 = por %p36, %p37
      %p39 = scmp.ne.s32.totalorder %s28, %s29
      %p40 = scmp.eq.s32.totalorder %s20, 0
      %p41 = por %p39, %p40
      %p42 = scmp.ne.s32.totalorder %s28, %s29
      %p43 = scmp.eq.s32.totalorder %s21, 1
      %p44 = por %p42, %p43
      %p46 = scmp.ne.s32.totalorder %s29, %s45
      %p47 = scmp.eq.s32.totalorder %s21, 0
      %p48 = por %p46, %p47
      %s50 = sadd.s32 %s49, 1
      %p53 = scmp.eq.s32.totalorder %s15, 1
      %p54 = scmp.ne.s32.totalorder %s49, %s51
      %p55 = scmp.eq.s32.totalorder %s15, 0
      %p56 = por %p54, %p55
      %p57 = scmp.ne.s32.totalorder %s49, %s51
      %p58 = scmp.eq.s32.totalorder %s20, 1
      %p59 = por %p57, %p58
      %p60 = scmp.ne.s32.totalorder %s51, %s52
      %p61 = scmp.eq.s32.totalorder %s20, 0
      %p62 = por %p60, %p61
      %p63 = scmp.ne.s32.totalorder %s51, %s52
      %p64 = scmp.eq.s32.totalorder %s21, 1
      %p65 = por %p63, %p64
      %p67 = scmp.ne.s32.totalorder %s52, %s66
      %p68 = scmp.eq.s32.totalorder %s21, 0
      %p69 = por %p67, %p68
      %s71 = sadd.s32 %s70, 1
      %p74 = scmp.eq.s32.totalorder %s15, 1
      %p75 = scmp.ne.s32.totalorder %s70, %s72
      %p76 = scmp.eq.s32.totalorder %s15, 0
      %p77 = por %p75, %p76
      %p78 = scmp.ne.s32.totalorder %s70, %s72
      %p79 = scmp.eq.s32.totalorder %s20, 1
      %p80 = por %p78, %p79
      %p81 = scmp.ne.s32.totalorder %s72, %s73
      %p82 = scmp.eq.s32.totalorder %s20, 0
      %p83 = por %p81, %p82
      %p84 = scmp.ne.s32.totalorder %s72, %s73
      %p85 = scmp.eq.s32.totalorder %s21, 1
      %p86 = por %p84, %p85
      %p88 = scmp.ne.s32.totalorder %s73, %s87
      %p89 = scmp.eq.s32.totalorder %s21, 0
      %p90 = por %p88, %p89
      %s91 = ssub.s32 %s15, %s22
      %p92 = scmp.eq.s32.totalorder %s91, 0
      %s94 = sadd.s32 %s93, 1
      %s95 = scalar_select %p92, %s93, %s94
      %p98 = pneg %p92
      %p99 = scmp.eq.s32.totalorder %s15, 1
      %p100 = por %p98, %p99
      %p101 = scmp.ne.s32.totalorder %s93, %s96
      %p102 = scmp.eq.s32.totalorder %s15, 0
      %p103 = por %p101, %p102
      %p104 = scmp.ne.s32.totalorder %s93, %s96
      %p105 = scmp.eq.s32.totalorder %s20, 1
      %p106 = por %p104, %p105
      %p107 = scmp.ne.s32.totalorder %s96, %s97
      %p108 = scmp.eq.s32.totalorder %s20, 0
      %p109 = por %p107, %p108
      %p110 = scmp.ne.s32.totalorder %s96, %s97
      %p111 = scmp.eq.s32.totalorder %s21, 1
      %p112 = por %p110, %p111
      %p114 = scmp.ne.s32.totalorder %s97, %s113
      %p115 = scmp.eq.s32.totalorder %s21, 0
      %p116 = por %p114, %p115
      %p117 = scmp.le.s32.totalorder 1, %s15
      %p118 = scmp.lt.s32.totalorder %s15, 3
      %p119 = pnand %p117, %p118
      %p120 = pneg %p119
      // Predicated region
      $region9: #{tpu_custom_call.1} parent=5 // pred_check
        _
      $region10: #{tpu_custom_call.1} parent=5 // pred_check_branch
        %122 = sbr.rel (%p119) target = $region12
      $region11: #{tpu_custom_call.1} parent=5 // pred_region
        %s123 = ssub.s32 %s15, 1
        // Predicated region
        $region13: #{tpu_custom_call.1} parent=11 // pred_check
          %p124 = pneg %p62
        $region14: #{tpu_custom_call.1} parent=11 // pred_check_branch
          %126 = sbr.rel (%p124) target = $region16
        $region15: #{tpu_custom_call.1} parent=11 // pred_region
          _
        $region16: #{tpu_custom_call.1} parent=11 // pred_fallthru
          _
        // Predicated region
        $region17: #{tpu_custom_call.1} parent=11 // pred_check
          %p127 = pneg %p83
        $region18: #{tpu_custom_call.1} parent=11 // pred_check_branch
          %129 = sbr.rel (%p127) target = $region20
        $region19: #{tpu_custom_call.1} parent=11 // pred_region
          _
        $region20: #{tpu_custom_call.1} parent=11 // pred_fallthru
          _
      $region12: #{tpu_custom_call.1} parent=5 // pred_fallthru
        _
      %p130 = scmp.lt.s32.totalorder %s15, 2
      // Predicated region
      $region21: #{tpu_custom_call.1} parent=5 // pred_check
        %p131 = pneg %p130
      $region22: #{tpu_custom_call.1} parent=5 // pred_check_branch
        %133 = sbr.rel (%p131) target = $region24
      $region23: #{tpu_custom_call.1} parent=5 // pred_region
        // Predicated region
        $region25: #{tpu_custom_call.1} parent=23 // pred_check
          %p134 = pneg %p35
        $region26: #{tpu_custom_call.1} parent=23 // pred_check_branch
          %136 = sbr.rel (%p134) target = $region28
        $region27: #{tpu_custom_call.1} parent=23 // pred_region
          %s137 = sand.u32 %s25, 1
          %s138 = scalar_lea.sflag [#allocation3], %s137
          %s139 = sand.u32 %s25, 1
          %s140 = smul.addr %s139, 16
          %s141 = scalar_lea.vmem [#allocation2], %s140
          %s143 = ssub.s32 256, 256
          %144 = vsyncadd %s138, %s143
          %s145 = smul.addr %s15, 2
          %s146 = smul.addr %s145, 128
          %s147 = scalar_lea.hbm %s0, %s146
          %s149 = sshll.u32 %s141, 4
          %s150 = int_to_ptr.vmem [resolvable:$true] %s149
          %152 = dma.hbm_to_vmem [thread:$0]  %s147, 256, %s150, %s138
        $region28: #{tpu_custom_call.1} parent=23 // pred_fallthru
          _
      $region24: #{tpu_custom_call.1} parent=5 // pred_fallthru
        _
      %p153 = scmp.le.s32.totalorder 1, %s15
      %p154 = scmp.lt.s32.totalorder %s15, 3
      %p155 = pnand %p153, %p154
      %p156 = pneg %p155
      // Predicated region
      $region29: #{tpu_custom_call.1} parent=5 // pred_check
        _
      $region30: #{tpu_custom_call.1} parent=5 // pred_check_branch
        %158 = sbr.rel (%p155) target = $region32
      $region31: #{tpu_custom_call.1} parent=5 // pred_region
        %s159 = ssub.s32 %s15, 1
        %s160 = sand.u32 %s28, 1
        %s161 = scalar_lea.sflag [#allocation3], %s160
        %s162 = sand.u32 %s28, 1
        %s163 = smul.addr %s162, 16
        %s164 = scalar_lea.vmem [#allocation2], %s163
        // Predicated region
        $region33: #{tpu_custom_call.1} parent=31 // pred_check
          %p165 = pneg %p41
        $region34: #{tpu_custom_call.1} parent=31 // pred_check_branch
          %167 = sbr.rel (%p165) target = $region36
        $region35: #{tpu_custom_call.1} parent=31 // pred_region
          %168 = dma.done %s161, 256
        $region36: #{tpu_custom_call.1} parent=31 // pred_fallthru
          _
        %s169 = sand.u32 %s28, 1
        %s170 = scalar_lea.sflag [#allocation3], %s169
        %s171 = sand.u32 %s28, 1
        %s172 = smul.addr %s171, 16
        %s173 = scalar_lea.vmem [#allocation2], %s172
        %p174 = pneg %p41
        %p175 = pneg %p38
        %p176 = pneg %p62
        %p177 = pneg %p59
        %p178 = pneg %p83
        %p179 = pneg %p80
        %p180 = pneg %p109
        %p181 = pneg %p106
        %s182 = sand.u32 %s96, 1
        %s183 = scalar_lea.sflag [#allocation4], %s182
        %s184 = sand.u32 %s96, 1
        %s185 = smul.addr %s184, 16
        %s186 = scalar_lea.vmem [#allocation5], %s185
        %v187 = vld [vmem:[%s164] sm:$0xff]
        %v188 = vld [vmem:[%s164 + $0x8] sm:$0xff]
        %v189 = vadd.f32 %v187, %v188
        %190 = vadd.xlane.f32.xlu0 %v189
        %v191 = vpop.xlane.xlu0 %190
        %v192 = vmul.f32 %v191, 0.00390625
        %v193 = vld [vmem:[%s1] sm:$0x3]
        %vm194 = vcmask 64512
        %v196 = vsel %vm194, %v193, 0
        %198 = vmatprep.subr.mxu0 0.0
        %199 = vmatpush1.msra.mxu0 %v192
        %200 = vmatprep.subr.mxu0 0.0
        %201 = vmatpush1.msra.mxu0 0.0
        %202 = vmatprep.subr.mxu0 0.0
        %203 = vmatpush1.msra.mxu0 0.0
        %204 = vmatprep.subr.mxu0 0.0
        %205 = vmatpush1.msra.mxu0 0.0
        %206 = vmatprep.subr.mxu0 0.0
        %207 = vmatpush1.msra.mxu0 0.0
        %208 = vmatprep.subr.mxu0 0.0
        %209 = vmatpush1.msra.mxu0 0.0
        %210 = vmatprep.subr.mxu0 0.0
        %211 = vmatpush1.msra.mxu0 0.0
        %212 = vmatprep.subr.mxu0 0.0
        %213 = vmatpush1.msra.mxu0 0.0
        %214 = vmatprep.subr.mxu0 0.0
        %215 = vmatpush1.msra.mxu0 0.0
        %216 = vmatprep.subr.mxu0 0.0
        %217 = vmatpush1.msra.mxu0 0.0
        %218 = vmatprep.subr.mxu0 0.0
        %219 = vmatpush1.msra.mxu0 0.0
        %220 = vmatprep.subr.mxu0 0.0
        %221 = vmatpush1.msra.mxu0 0.0
        %222 = vmatprep.subr.mxu0 0.0
        %223 = vmatpush1.msra.mxu0 0.0
        %224 = vmatprep.subr.mxu0 0.0
        %225 = vmatpush1.msra.mxu0 0.0
        %226 = vmatprep.subr.mxu0 0.0
        %227 = vmatpush1.msra.mxu0 0.0
        %228 = vmatprep.subr.mxu0 0.0
        %229 = vmatpush1.msra.mxu0 0.0
        %230 = vmatprep.subr.mxu0 0.0
        %231 = vmatpush1.msra.mxu0 0.0
        %232 = vmatprep.subr.mxu0 0.0
        %233 = vmatpush1.msra.mxu0 0.0
        %234 = vmatprep.subr.mxu0 0.0
        %235 = vmatpush1.msra.mxu0 0.0
        %236 = vmatprep.subr.mxu0 0.0
        %237 = vmatpush1.msra.mxu0 0.0
        %238 = vmatprep.subr.mxu0 0.0
        %239 = vmatpush1.msra.mxu0 0.0
        %240 = vmatprep.subr.mxu0 0.0
        %241 = vmatpush1.msra.mxu0 0.0
        %242 = vmatprep.subr.mxu0 0.0
        %243 = vmatpush1.msra.mxu0 0.0
        %244 = vmatprep.subr.mxu0 0.0
        %245 = vmatpush1.msra.mxu0 0.0
        %246 = vmatprep.subr.mxu0 0.0
        %247 = vmatpush1.msra.mxu0 0.0
        %248 = vmatprep.subr.mxu0 0.0
        %249 = vmatpush1.msra.mxu0 0.0
        %250 = vmatprep.subr.mxu0 0.0
        %251 = vmatpush1.msra.mxu0 0.0
        %252 = vmatprep.subr.mxu0 0.0
        %253 = vmatpush1.msra.mxu0 0.0
        %254 = vmatprep.subr.mxu0 0.0
        %255 = vmatpush1.msra.mxu0 0.0
        %256 = vmatprep.subr.mxu0 0.0
        %257 = vmatpush1.msra.mxu0 0.0
        %258 = vmatprep.subr.mxu0 0.0
        %259 = vmatpush1.msra.mxu0 0.0
        %260 = vmatprep.subr.mxu0 0.0
        %261 = vmatpush1.msra.mxu0 0.0
        %262 = vmatprep.mubr.f32.mxu0 0.0
        %263 = vmatmul.mubr.f32.gmra.mrb[0].mxu0 %v196
        %v264 = vpop.f32.mrb[0].mxu0
        %v265 = vadd.f32 0.0, %v264
        %v266 = vpop.f32.mrb[0].mxu0
        %267 = vdwg.mxu0
        %v268 = vmax.f32 %v265, 0.0
        %v269 = vld [vmem:[%s2] sm:$0xff]
        %vm270 = vcmask 15360
        %v272 = vsel %vm270, %v269, 0
        %vm274 = vcmask 1041408
        %v276 = vsel %vm274, %v268, 0
        %278 = vmatprep.subr.mxu0 0.0
        %279 = vmatpush1.msra.mxu0 %v276
        %280 = vmatprep.subr.mxu0 0.0
        %281 = vmatpush1.msra.mxu0 0.0
        %282 = vmatprep.subr.mxu0 0.0
        %283 = vmatpush1.msra.mxu0 0.0
        %284 = vmatprep.subr.mxu0 0.0
        %285 = vmatpush1.msra.mxu0 0.0
        %286 = vmatprep.subr.mxu0 0.0
        %287 = vmatpush1.msra.mxu0 0.0
        %288 = vmatprep.subr.mxu0 0.0
        %289 = vmatpush1.msra.mxu0 0.0
        %290 = vmatprep.subr.mxu0 0.0
        %291 = vmatpush1.msra.mxu0 0.0
        %292 = vmatprep.subr.mxu0 0.0
        %293 = vmatpush1.msra.mxu0 0.0
        %294 = vmatprep.subr.mxu0 0.0
        %295 = vmatpush1.msra.mxu0 0.0
        %296 = vmatprep.subr.mxu0 0.0
        %297 = vmatpush1.msra.mxu0 0.0
        %298 = vmatprep.subr.mxu0 0.0
        %299 = vmatpush1.msra.mxu0 0.0
        %300 = vmatprep.subr.mxu0 0.0
        %301 = vmatpush1.msra.mxu0 0.0
        %302 = vmatprep.subr.mxu0 0.0
        %303 = vmatpush1.msra.mxu0 0.0
        %304 = vmatprep.subr.mxu0 0.0
        %305 = vmatpush1.msra.mxu0 0.0
        %306 = vmatprep.subr.mxu0 0.0
        %307 = vmatpush1.msra.mxu0 0.0
        %308 = vmatprep.subr.mxu0 0.0
        %309 = vmatpush1.msra.mxu0 0.0
        %310 = vmatprep.subr.mxu0 0.0
        %311 = vmatpush1.msra.mxu0 0.0
        %312 = vmatprep.subr.mxu0 0.0
        %313 = vmatpush1.msra.mxu0 0.0
        %314 = vmatprep.subr.mxu0 0.0
        %315 = vmatpush1.msra.mxu0 0.0
        %316 = vmatprep.subr.mxu0 0.0
        %317 = vmatpush1.msra.mxu0 0.0
        %318 = vmatprep.subr.mxu0 0.0
        %319 = vmatpush1.msra.mxu0 0.0
        %320 = vmatprep.subr.mxu0 0.0
        %321 = vmatpush1.msra.mxu0 0.0
        %322 = vmatprep.subr.mxu0 0.0
        %323 = vmatpush1.msra.mxu0 0.0
        %324 = vmatprep.subr.mxu0 0.0
        %325 = vmatpush1.msra.mxu0 0.0
        %326 = vmatprep.subr.mxu0 0.0
        %327 = vmatpush1.msra.mxu0 0.0
        %328 = vmatprep.subr.mxu0 0.0
        %329 = vmatpush1.msra.mxu0 0.0
        %330 = vmatprep.subr.mxu0 0.0
        %331 = vmatpush1.msra.mxu0 0.0
        %332 = vmatprep.subr.mxu0 0.0
        %333 = vmatpush1.msra.mxu0 0.0
        %334 = vmatprep.subr.mxu0 0.0
        %335 = vmatpush1.msra.mxu0 0.0
        %336 = vmatprep.subr.mxu0 0.0
        %337 = vmatpush1.msra.mxu0 0.0
        %338 = vmatprep.subr.mxu0 0.0
        %339 = vmatpush1.msra.mxu0 0.0
        %340 = vmatprep.subr.mxu0 0.0
        %341 = vmatpush1.msra.mxu0 0.0
        %342 = vmatprep.mubr.f32.mxu0 0.0
        %343 = vmatmul.mubr.f32.gmra.mrb[0].mxu0 %v272
        %v344 = vpop.f32.mrb[0].mxu0
        %v345 = vadd.f32 0.0, %v344
        %v346 = vpop.f32.mrb[0].mxu0
        %347 = vdwg.mxu0
        %v348 = vxor.u32 %v345, 2147483648
        %v349 = vmul.f32 %v348, 1.442695
        %v350 = vpow.pop %v349
        %v351 = vadd.f32 %v350, 1.0
        %v352 = vrcp.pop %v351
        %v353 = vmul.f32 1.0, %v352
        %355 = vset.pattern.permute.xlu0 0
        %356 = vperm.xlu0 %355, %v353
        %v357 = vpop.permute.xlu0 %356
        %v359 = vmul.f32 %v187, %v357
        %v360 = vmul.f32 %v188, %v357
        %361 = vst [vmem:[%s186] sm:$0xff] %v359
        %362 = vst [vmem:[%s186 + $0x8] sm:$0xff] %v360
        %s363 = sand.u32 %s96, 1
        %s364 = scalar_lea.sflag [#allocation4], %s363
        %s365 = sand.u32 %s96, 1
        %s366 = smul.addr %s365, 16
        %s367 = scalar_lea.vmem [#allocation5], %s366
        // Predicated region
        $region37: #{tpu_custom_call.1} parent=31 // pred_check
          %p368 = pneg %p106
        $region38: #{tpu_custom_call.1} parent=31 // pred_check_branch
          %370 = sbr.rel (%p368) target = $region40
        $region39: #{tpu_custom_call.1} parent=31 // pred_region
          %s372 = ssub.s32 256, 256
          %373 = vsyncadd %s364, %s372
          %s374 = smul.addr %s20, 2
          %s375 = smul.addr %s374, 128
          %s376 = scalar_lea.hbm %s3, %s375
          %s378 = sshll.u32 %s367, 4
          %s379 = int_to_ptr.vmem [resolvable:$true] %s378
          %381 = dma.vmem_to_hbm [thread:$0]  %s379, 256, %s376, %s364
        $region40: #{tpu_custom_call.1} parent=31 // pred_fallthru
          _
      $region32: #{tpu_custom_call.1} parent=5 // pred_fallthru
        _
      %p382 = scmp.le.s32.totalorder 2, %s15
      // Predicated region
      $region41: #{tpu_custom_call.1} parent=5 // pred_check
        %p383 = pneg %p382
      $region42: #{tpu_custom_call.1} parent=5 // pred_check_branch
        %385 = sbr.rel (%p383) target = $region44
      $region43: #{tpu_custom_call.1} parent=5 // pred_region
        %s386 = ssub.s32 %s15, 2
        // Predicated region
        $region45: #{tpu_custom_call.1} parent=43 // pred_check
          %p387 = pneg %p112
        $region46: #{tpu_custom_call.1} parent=43 // pred_check_branch
          %389 = sbr.rel (%p387) target = $region48
        $region47: #{tpu_custom_call.1} parent=43 // pred_region
          %s390 = sand.u32 %s97, 1
          %s391 = scalar_lea.sflag [#allocation4], %s390
          %s392 = sand.u32 %s97, 1
          %s393 = smul.addr %s392, 16
          %s394 = scalar_lea.vmem [#allocation5], %s393
          %395 = dma.done %s391, 256
        $region48: #{tpu_custom_call.1} parent=43 // pred_fallthru
          _
      $region44: #{tpu_custom_call.1} parent=5 // pred_fallthru
        _
    $region6: #{tpu_custom_call.1} parent=1 // loop_footer
      %s19 = sadd.s32 1, %s15
    $region7: #{tpu_custom_call.1} parent=1 // loop_footer_branch
      %14 = sbr.rel target = $region3
    $region8: #{tpu_custom_call.1} parent=1 // loop_exit
      _
    %396 = vsyncpa [#allocation3], 1
    %s397 = scalar_lea.sflag [#allocation3], 1
    %398 = vsyncpa %s397, 1
    %399 = vsyncpa [#allocation4], 1
    %s400 = scalar_lea.sflag [#allocation4], 1
    %401 = vsyncpa %s400, 1

</llo_original>
